<compile_context>
chip_gen: v5e
topology: v5e:2x2
jax: 0.10.0
libtpu: 0.0.40
codegen_flags: <defaults>
</compile_context>

<pallas_src>
import jax
import jax.numpy as jnp
from jax.experimental import pallas as pl
from jax.experimental.pallas import tpu as pltpu


def mlp_full_kernel(x_ref, w1_ref, t1_ref, w2_ref, t2_ref, w3_ref, b3_ref, o_ref):
    """One batch tile: x (TB, D) f32 -> out (TB, 1) f32."""
    # Cast the streamed f32 tile to bf16 in-kernel (tiny: TB x D) so the
    # wrapper never materializes an extra HBM copy of x.
    x = x_ref[...].astype(jnp.bfloat16)

    # Layer 1: Linear(D,128) + folded BN + ReLU   (Dropout = identity in eval)
    h1 = jnp.dot(x, w1_ref[...], preferred_element_type=jnp.float32)
    h1 = jnp.maximum(h1 + t1_ref[...], 0.0)

    # Layer 2: Linear(128,64) + folded BN + ReLU  (Dropout = identity in eval)
    h2 = jnp.dot(h1.astype(jnp.bfloat16), w2_ref[...],
                 preferred_element_type=jnp.float32)
    h2 = jnp.maximum(h2 + t2_ref[...], 0.0)

    # Layer 3: Linear(64,1) as VPU multiply + lane reduction (N=1 on the MXU
    # would waste the array and gain nothing).
    o_ref[...] = jnp.sum(h2 * w3_ref[...], axis=-1, keepdims=True) + b3_ref[...]


def _round_up(v, m):
    return ((v + m - 1) // m) * m


def mlp_full_pallas(x, params, tb=None):
    """x: (B, D) f32, params: pre-folded (see fold_params). Returns (B, 1) f32."""
    w1f, t1, w2f, t2, w3r, b3 = params
    B, D = x.shape

    # Generation-aware tile / VMEM budget (v5e/v6e: 128 MiB VMEM, v7x: 64 MiB).
    try:
        vmem_cap = pltpu.get_tpu_info().vmem_capacity_bytes
    except Exception:
        vmem_cap = 64 << 20                       # conservative (v7x-sized)
    vmem_limit = min(96 << 20, (vmem_cap * 3) // 4)

    if tb is None:
        tb = 16384 if vmem_cap >= (96 << 20) else 8192
        # Keep >= ~4 grid steps for large B so both v7x TensorCores get work.
        tb = min(tb, max(8, _round_up((B + 3) // 4, 8)))
    TB = max(8, _round_up(min(tb, _round_up(B, 8)), 8))

    grid = (pl.cdiv(B, TB),)   # ragged last tile: Pallas masks the partial block

    # Constant index_map -> DMA'd once, stays VMEM-resident across the grid.
    resident = lambda a: pl.BlockSpec(a.shape, lambda i: (0,) * a.ndim)

    return pl.pallas_call(
        mlp_full_kernel,
        out_shape=jax.ShapeDtypeStruct((B, 1), jnp.float32),
        grid=grid,
        in_specs=[
            pl.BlockSpec((TB, D), lambda i: (i, 0)),   # x streamed per tile (f32)
            resident(w1f), resident(t1),
            resident(w2f), resident(t2),
            resident(w3r), resident(b3),
        ],
        out_specs=pl.BlockSpec((TB, 1), lambda i: (i, 0)),
        compiler_params=pltpu.CompilerParams(
            dimension_semantics=("parallel",),          # shards grid on v7x dual TC
            vmem_limit_bytes=vmem_limit),
    )(x, w1f, t1, w2f, t2, w3r, b3)


def fold_params(w1, b1, g1, be1, m1, v1, w2, b2, g2, be2, m2, v2, w3, b3, eps=1e-5):
    """Fold eval-mode BatchNorm1d + Linear bias into weights/shifts (done once).

      BN(x W + b) = x (W * s) + ((b - mean) * s + beta),  s = gamma / sqrt(var + eps)
    Scaled weights are cast to bf16 (MXU inputs); shifts / last layer stay f32.
    """
    s1 = g1 / jnp.sqrt(v1 + eps)
    t1 = ((b1 - m1) * s1 + be1)[None, :].astype(jnp.float32)      # (1, 128)
    w1f = (w1 * s1[None, :]).astype(jnp.bfloat16)                 # (D, 128)

    s2 = g2 / jnp.sqrt(v2 + eps)
    t2 = ((b2 - m2) * s2 + be2)[None, :].astype(jnp.float32)      # (1, 64)
    w2f = (w2 * s2[None, :]).astype(jnp.bfloat16)                 # (128, 64)

    w3r = w3.reshape(1, -1).astype(jnp.float32)                   # (1, 64)
    b3r = b3.reshape(1, 1).astype(jnp.float32)                    # (1, 1)
    return (w1f, t1, w2f, t2, w3r, b3r)


def make_params(key, input_dim, h1=128, h2=64, eps=1e-5):
    """Deterministic synthetic MLPFull parameters, pre-folded for the kernel."""
    ks = jax.random.split(key, 14)
    w1 = jax.random.normal(ks[0], (input_dim, h1), jnp.float32) * 0.1
    b1 = jax.random.normal(ks[1], (h1,), jnp.float32) * 0.1
    g1 = 1.0 + 0.1 * jax.random.normal(ks[2], (h1,), jnp.float32)
    be1 = 0.1 * jax.random.normal(ks[3], (h1,), jnp.float32)
    m1 = 0.1 * jax.random.normal(ks[4], (h1,), jnp.float32)
    v1 = jnp.abs(1.0 + 0.1 * jax.random.normal(ks[5], (h1,), jnp.float32))

    w2 = jax.random.normal(ks[6], (h1, h2), jnp.float32) * 0.1
    b2 = jax.random.normal(ks[7], (h2,), jnp.float32) * 0.1
    g2 = 1.0 + 0.1 * jax.random.normal(ks[8], (h2,), jnp.float32)
    be2 = 0.1 * jax.random.normal(ks[9], (h2,), jnp.float32)
    m2 = 0.1 * jax.random.normal(ks[10], (h2,), jnp.float32)
    v2 = jnp.abs(1.0 + 0.1 * jax.random.normal(ks[11], (h2,), jnp.float32))

    w3 = jax.random.normal(ks[12], (h2, 1), jnp.float32) * 0.1
    b3 = jax.random.normal(ks[13], (1, 1), jnp.float32) * 0.1
    return fold_params(w1, b1, g1, be1, m1, v1, w2, b2, g2, be2, m2, v2, w3, b3, eps)


def mlp_full_ref(x, params):
    """Pure-JAX reference with the same folded-BN / mixed-precision recipe."""
    w1f, t1, w2f, t2, w3r, b3 = params
    h1 = jnp.maximum(
        jnp.dot(x.astype(jnp.bfloat16), w1f, preferred_element_type=jnp.float32) + t1, 0.0)
    h2 = jnp.maximum(
        jnp.dot(h1.astype(jnp.bfloat16), w2f, preferred_element_type=jnp.float32) + t2, 0.0)
    return jnp.sum(h2 * w3r, axis=-1, keepdims=True) + b3


if __name__ == "__main__":
    key = jax.random.PRNGKey(0)
    batch, input_dim = 8, 16   # small tabular-feature style input

    k_x, k_p = jax.random.split(key)
    x = jax.random.normal(k_x, (batch, input_dim), jnp.float32)
    params = make_params(k_p, input_dim)

    out = jax.block_until_ready(mlp_full_pallas(x, params))
    ref = mlp_full_ref(x, params)

    assert out.shape == (batch, 1)
    assert jnp.allclose(out, ref, atol=2e-3, rtol=2e-3), "mismatch vs reference"

    print("KERNEL_OK")
</pallas_src>

<mosaic_0001>
module attributes {stable_mosaic.version = 11 : i64} {
  func.func @mlp_full_kernel(%arg0: i32, %arg1: memref<8x16xf32, #tpu.memory_space<vmem>>, %arg2: memref<16x128xbf16, #tpu.memory_space<vmem>>, %arg3: memref<1x128xf32, #tpu.memory_space<vmem>>, %arg4: memref<128x64xbf16, #tpu.memory_space<vmem>>, %arg5: memref<1x64xf32, #tpu.memory_space<vmem>>, %arg6: memref<1x64xf32, #tpu.memory_space<vmem>>, %arg7: memref<1x1xf32, #tpu.memory_space<vmem>>, %arg8: memref<8x1xf32, #tpu.memory_space<vmem>>) attributes {dimension_semantics = [#tpu.dimension_semantics<parallel>], iteration_bounds = array<i64: 1>, scalar_prefetch = 0 : i64, scratch_operands = 0 : i64, tpu.core_type = #tpu.core_type<tc>, window_params = [{transform_indices = @transform_0, window_bounds = array<i64: 8, 16>}, {pipeline_mode = #tpu.pipeline_mode<synchronous>, transform_indices = @transform_1, window_bounds = array<i64: 16, 128>}, {pipeline_mode = #tpu.pipeline_mode<synchronous>, transform_indices = @transform_2, window_bounds = array<i64: 1, 128>}, {pipeline_mode = #tpu.pipeline_mode<synchronous>, transform_indices = @transform_3, window_bounds = array<i64: 128, 64>}, {pipeline_mode = #tpu.pipeline_mode<synchronous>, transform_indices = @transform_4, window_bounds = array<i64: 1, 64>}, {pipeline_mode = #tpu.pipeline_mode<synchronous>, transform_indices = @transform_5, window_bounds = array<i64: 1, 64>}, {pipeline_mode = #tpu.pipeline_mode<synchronous>, transform_indices = @transform_6, window_bounds = array<i64: 1, 1>}, {transform_indices = @transform_7, window_bounds = array<i64: 8, 1>}]} {
    %c0 = arith.constant 0 : index
    %c0_0 = arith.constant 0 : index
    %0 = vector.load %arg1[%c0, %c0_0] : memref<8x16xf32, #tpu.memory_space<vmem>>, vector<8x16xf32>
    %1 = arith.truncf %0 : vector<8x16xf32> to vector<8x16xbf16>
    %c0_1 = arith.constant 0 : index
    %c0_2 = arith.constant 0 : index
    %2 = vector.load %arg2[%c0_1, %c0_2] : memref<16x128xbf16, #tpu.memory_space<vmem>>, vector<16x128xbf16>
    %cst = arith.constant dense<0.000000e+00> : vector<8x128xf32>
    %3 = tpu.matmul %1, %2, %cst {dimension_numbers = #tpu.dot_dimension_numbers<[1], [0], [0], [1], [0, 0, 1, 1], [], []>} : vector<8x16xbf16>, vector<16x128xbf16>, vector<8x128xf32> -> vector<8x128xf32>
    %c0_3 = arith.constant 0 : index
    %c0_4 = arith.constant 0 : index
    %4 = vector.load %arg3[%c0_3, %c0_4] : memref<1x128xf32, #tpu.memory_space<vmem>>, vector<1x128xf32>
    %5 = vector.broadcast %4 : vector<1x128xf32> to vector<8x128xf32>
    %6 = arith.addf %3, %5 : vector<8x128xf32>
    %cst_5 = arith.constant 0.000000e+00 : f32
    %7 = vector.broadcast %cst_5 : f32 to vector<8x128xf32>
    %8 = arith.maximumf %6, %7 : vector<8x128xf32>
    %9 = arith.truncf %8 : vector<8x128xf32> to vector<8x128xbf16>
    %c0_6 = arith.constant 0 : index
    %c0_7 = arith.constant 0 : index
    %10 = vector.load %arg4[%c0_6, %c0_7] : memref<128x64xbf16, #tpu.memory_space<vmem>>, vector<128x64xbf16>
    %cst_8 = arith.constant dense<0.000000e+00> : vector<8x64xf32>
    %11 = tpu.matmul %9, %10, %cst_8 {dimension_numbers = #tpu.dot_dimension_numbers<[1], [0], [0], [1], [0, 0, 1, 1], [], []>} : vector<8x128xbf16>, vector<128x64xbf16>, vector<8x64xf32> -> vector<8x64xf32>
    %c0_9 = arith.constant 0 : index
    %c0_10 = arith.constant 0 : index
    %12 = vector.load %arg5[%c0_9, %c0_10] : memref<1x64xf32, #tpu.memory_space<vmem>>, vector<1x64xf32>
    %13 = vector.broadcast %12 : vector<1x64xf32> to vector<8x64xf32>
    %14 = arith.addf %11, %13 : vector<8x64xf32>
    %cst_11 = arith.constant 0.000000e+00 : f32
    %15 = vector.broadcast %cst_11 : f32 to vector<8x64xf32>
    %16 = arith.maximumf %14, %15 : vector<8x64xf32>
    %c0_12 = arith.constant 0 : index
    %c0_13 = arith.constant 0 : index
    %17 = vector.load %arg6[%c0_12, %c0_13] : memref<1x64xf32, #tpu.memory_space<vmem>>, vector<1x64xf32>
    %18 = vector.broadcast %17 : vector<1x64xf32> to vector<8x64xf32>
    %19 = arith.mulf %16, %18 : vector<8x64xf32>
    %cst_14 = arith.constant dense<0.000000e+00> : vector<8xf32>
    %20 = vector.multi_reduction <add>, %19, %cst_14 [1] : vector<8x64xf32> to vector<8xf32>
    %21 = vector.shape_cast %20 : vector<8xf32> to vector<8x1xf32>
    %c0_15 = arith.constant 0 : index
    %c0_16 = arith.constant 0 : index
    %22 = vector.load %arg7[%c0_15, %c0_16] : memref<1x1xf32, #tpu.memory_space<vmem>>, vector<1x1xf32>
    %23 = vector.broadcast %22 : vector<1x1xf32> to vector<8x1xf32>
    %24 = arith.addf %21, %23 : vector<8x1xf32>
    %c0_17 = arith.constant 0 : index
    %c0_18 = arith.constant 0 : index
    %25 = vector.load %arg8[%c0_17, %c0_18] : memref<8x1xf32, #tpu.memory_space<vmem>>, vector<8x1xf32>
    tpu.vector_store %arg8[%c0_17, %c0_18], %24 {strides = array<i32>} : memref<8x1xf32, #tpu.memory_space<vmem>>, vector<8x1xf32>,
    return
  }
  func.func @transform_0(%arg0: i32) -> (i32, i32) {
    %c0_i32 = arith.constant 0 : i32
    %c0_i32_0 = arith.constant 0 : i32
    return %arg0, %c0_i32 : i32, i32
  }
  func.func @transform_1(%arg0: i32) -> (i32, i32) {
    %c0_i32 = arith.constant 0 : i32
    %c0_i32_0 = arith.constant 0 : i32
    %c0_i32_1 = arith.constant 0 : i32
    return %c0_i32, %c0_i32_0 : i32, i32
  }
  func.func @transform_2(%arg0: i32) -> (i32, i32) {
    %c0_i32 = arith.constant 0 : i32
    %c0_i32_0 = arith.constant 0 : i32
    %c0_i32_1 = arith.constant 0 : i32
    return %c0_i32, %c0_i32_0 : i32, i32
  }
  func.func @transform_3(%arg0: i32) -> (i32, i32) {
    %c0_i32 = arith.constant 0 : i32
    %c0_i32_0 = arith.constant 0 : i32
    %c0_i32_1 = arith.constant 0 : i32
    return %c0_i32, %c0_i32_0 : i32, i32
  }
  func.func @transform_4(%arg0: i32) -> (i32, i32) {
    %c0_i32 = arith.constant 0 : i32
    %c0_i32_0 = arith.constant 0 : i32
    %c0_i32_1 = arith.constant 0 : i32
    return %c0_i32, %c0_i32_0 : i32, i32
  }
  func.func @transform_5(%arg0: i32) -> (i32, i32) {
    %c0_i32 = arith.constant 0 : i32
    %c0_i32_0 = arith.constant 0 : i32
    %c0_i32_1 = arith.constant 0 : i32
    return %c0_i32, %c0_i32_0 : i32, i32
  }
  func.func @transform_6(%arg0: i32) -> (i32, i32) {
    %c0_i32 = arith.constant 0 : i32
    %c0_i32_0 = arith.constant 0 : i32
    %c0_i32_1 = arith.constant 0 : i32
    return %c0_i32, %c0_i32_0 : i32, i32
  }
  func.func @transform_7(%arg0: i32) -> (i32, i32) {
    %c0_i32 = arith.constant 0 : i32
    %c0_i32_0 = arith.constant 0 : i32
    return %arg0, %c0_i32 : i32, i32
  }
}

</mosaic_0001>

<llo_original>
// kernel: tpu_custom_call.1
$region0: #{tpu_custom_call.1}
  #allocation0 [shape = 'u32[]', space=smem, size = 0x4, offset = 0x4, fixed_abs, tag = 'smem constant byte address 0x4 - core index']
  #allocation1 [shape = 'u32[72,128]{1,0:T(1,128)}', space=vmem, size = 0x9000, scoped, tag = 'internal scratch']
  #allocation2 [shape = 'f32[1,1]{1,0:T(1,128)S(1)}', space=vmem, size = 0x200, scoped, tag = 'scoped memory for tpu_custom_call.1']
  %s0 = inlined_call_operand.vmem [shape: f32[8,16], index: 0, kind: input, shape index: {}]
  %s1 = inlined_call_operand.vmem [shape: bf16[16,128], index: 1, kind: input, shape index: {}]
  %s2 = inlined_call_operand.vmem [shape: f32[1,128], index: 2, kind: input, shape index: {}]
  %s3 = inlined_call_operand.vmem [shape: bf16[128,64], index: 3, kind: input, shape index: {}]
  %s4 = inlined_call_operand.vmem [shape: f32[1,64], index: 4, kind: input, shape index: {}]
  %s5 = inlined_call_operand.vmem [shape: f32[1,64], index: 5, kind: input, shape index: {}]
  %s6 = inlined_call_operand.<no memory space> [shape: f32[1,1], index: 6, kind: input, shape index: {}]
  %s7 = inlined_call_operand.vmem [shape: f32[8,1], index: 7, kind: output, shape index: {}]
  %s8 = sld [smem:[#allocation0]]
  $region38: #{tpu_custom_call.1} parent=0
    _
  %s10 = ssub.s32 1, %s8
  %s11 = scalar_select 0, %s10, %s8
  %v12 = vstv %s6
  %13 = vst [vmem:[#allocation2] sm:$0x1] %v12
  // Predicated region
  $region2: #{tpu_custom_call.1} parent=0 // pred_check
    _
  $region3: #{tpu_custom_call.1} parent=0 // pred_check_branch
    %15 = sbr.rel (0) target = $region5
  $region4: #{tpu_custom_call.1} parent=0 // pred_region
    _
  $region5: #{tpu_custom_call.1} parent=0 // pred_fallthru
    _
  // Predicated region
  $region6: #{tpu_custom_call.1} parent=0 // pred_check
    _
  $region7: #{tpu_custom_call.1} parent=0 // pred_check_branch
    %17 = sbr.rel (0) target = $region9
  $region8: #{tpu_custom_call.1} parent=0 // pred_region
    _
  $region9: #{tpu_custom_call.1} parent=0 // pred_fallthru
    _
  // Predicated region
  $region10: #{tpu_custom_call.1} parent=0 // pred_check
    _
  $region11: #{tpu_custom_call.1} parent=0 // pred_check_branch
    %19 = sbr.rel (0) target = $region13
  $region12: #{tpu_custom_call.1} parent=0 // pred_region
    _
  $region13: #{tpu_custom_call.1} parent=0 // pred_fallthru
    _
  // Predicated region
  $region14: #{tpu_custom_call.1} parent=0 // pred_check
    _
  $region15: #{tpu_custom_call.1} parent=0 // pred_check_branch
    %21 = sbr.rel (0) target = $region17
  $region16: #{tpu_custom_call.1} parent=0 // pred_region
    _
  $region17: #{tpu_custom_call.1} parent=0 // pred_fallthru
    _
  // Predicated region
  $region18: #{tpu_custom_call.1} parent=0 // pred_check
    _
  $region19: #{tpu_custom_call.1} parent=0 // pred_check_branch
    %23 = sbr.rel (0) target = $region21
  $region20: #{tpu_custom_call.1} parent=0 // pred_region
    _
  $region21: #{tpu_custom_call.1} parent=0 // pred_fallthru
    _
  // Predicated region
  $region22: #{tpu_custom_call.1} parent=0 // pred_check
    _
  $region23: #{tpu_custom_call.1} parent=0 // pred_check_branch
    %25 = sbr.rel (0) target = $region25
  $region24: #{tpu_custom_call.1} parent=0 // pred_region
    _
  $region25: #{tpu_custom_call.1} parent=0 // pred_fallthru
    _
  // Predicated region
  $region26: #{tpu_custom_call.1} parent=0 // pred_check
    _
  $region27: #{tpu_custom_call.1} parent=0 // pred_check_branch
    %27 = sbr.rel (0) target = $region29
  $region28: #{tpu_custom_call.1} parent=0 // pred_region
    _
  $region29: #{tpu_custom_call.1} parent=0 // pred_fallthru
    _
  %v29 = vld [vmem:[%s0] sm:$0xff]
  %v30 = vpack.c.bf16 %v29, %v29
  %v31 = vld [vmem:[%s1] sm:$0xf]
  %v32 = vld [vmem:[%s1 + $0x4] sm:$0xf]
  %v33 = vld [vmem:[%s2] sm:$0x1]
  %v35 = vperm.slane %v33, 0
  %v39 = vunpack.c.l.b16 %v31
  %v40 = vunpack.c.l.b16 %v32
  %v41 = vpack.c.b16 %v40, %v39
  %vm43 = vcmask 130048
  %v45 = vsel %vm43, %v30, 0
  %47 = vmatpush.bf16.msra.mxu0 0
  %48 = vmatpush.bf16.msra.mxu0 0
  %49 = vmatpush.bf16.msra.mxu0 0
  %50 = vmatpush.bf16.msra.mxu0 0
  %51 = vmatpush.bf16.msra.mxu0 0
  %52 = vmatpush.bf16.msra.mxu0 0
  %53 = vmatpush.bf16.msra.mxu0 0
  %54 = vmatpush.bf16.msra.mxu0 %v41
  %55 = vmatmul.bf16.gmra.mxu0 %v45
  %v56 = vpop.f32.mrf.mxu0
  %v57 = vadd.f32 %v35, %v56
  %v58 = vpop.f32.mrf.mxu0
  %59 = vdwg.mxu0
  %v60 = vmax.f32 %v57, 0.0
  %v61 = vpack.c.bf16 %v60, %v60
  %v62 = vld [vmem:[%s3] sm:$0xf]
  %v63 = vld [vmem:[%s3 + $0x4] sm:$0xf]
  %v64 = vld [vmem:[%s3 + $0x8] sm:$0xf]
  %v65 = vld [vmem:[%s3 + $0xc] sm:$0xf]
  %v66 = vld [vmem:[%s3 + $0x10] sm:$0xf]
  %v67 = vld [vmem:[%s3 + $0x14] sm:$0xf]
  %v68 = vld [vmem:[%s3 + $0x18] sm:$0xf]
  %v69 = vld [vmem:[%s3 + $0x1c] sm:$0xf]
  %v70 = vld [vmem:[%s3 + $0x20] sm:$0xf]
  %v71 = vld [vmem:[%s3 + $0x24] sm:$0xf]
  %v72 = vld [vmem:[%s3 + $0x28] sm:$0xf]
  %v73 = vld [vmem:[%s3 + $0x2c] sm:$0xf]
  %v74 = vld [vmem:[%s3 + $0x30] sm:$0xf]
  %v75 = vld [vmem:[%s3 + $0x34] sm:$0xf]
  %v76 = vld [vmem:[%s3 + $0x38] sm:$0xf]
  %v77 = vld [vmem:[%s3 + $0x3c] sm:$0xf]
  %v78 = vld [vmem:[%s4] sm:$0x1]
  %v80 = vperm.slane %v78, 0
  %v98 = vunpack.c.l.b16 %v62
  %v99 = vunpack.c.l.b16 %v63
  %v100 = vunpack.c.l.b16 %v64
  %v101 = vunpack.c.l.b16 %v65
  %v102 = vunpack.c.l.b16 %v66
  %v103 = vunpack.c.l.b16 %v67
  %v104 = vunpack.c.l.b16 %v68
  %v105 = vunpack.c.l.b16 %v69
  %v106 = vunpack.c.l.b16 %v70
  %v107 = vunpack.c.l.b16 %v71
  %v108 = vunpack.c.l.b16 %v72
  %v109 = vunpack.c.l.b16 %v73
  %v110 = vunpack.c.l.b16 %v74
  %v111 = vunpack.c.l.b16 %v75
  %v112 = vunpack.c.l.b16 %v76
  %v113 = vunpack.c.l.b16 %v77
  %v114 = vpack.c.b16 %v99, %v98
  %v115 = vpack.c.b16 %v101, %v100
  %v116 = vpack.c.b16 %v103, %v102
  %v117 = vpack.c.b16 %v105, %v104
  %v118 = vpack.c.b16 %v107, %v106
  %v119 = vpack.c.b16 %v109, %v108
  %v120 = vpack.c.b16 %v111, %v110
  %v121 = vpack.c.b16 %v113, %v112
  %130 = vmatpush.bf16.msra.mxu0 %v121
  %131 = vmatpush.bf16.msra.mxu0 %v120
  %132 = vmatpush.bf16.msra.mxu0 %v119
  %133 = vmatpush.bf16.msra.mxu0 %v118
  %134 = vmatpush.bf16.msra.mxu0 %v117
  %135 = vmatpush.bf16.msra.mxu0 %v116
  %136 = vmatpush.bf16.msra.mxu0 %v115
  %137 = vmatpush.bf16.msra.mxu0 %v114
  %138 = vmatmul.bf16.gmra.mxu0 %v61
  %v139 = vpop.f32.mrf.mxu0
  %v140 = vadd.f32 %v80, %v139
  %v141 = vpop.f32.mrf.mxu0
  %142 = vdwg.mxu0
  %v143 = vmax.f32 %v140, 0.0
  %v144 = vld [vmem:[%s5] sm:$0x1]
  %v146 = vperm.slane %v144, 0
  %v148 = vmul.f32 %v143, %v146
  %vm149 = vcmask 523264
  %v150 = vsel %vm149, %v148, 0.0
  %151 = vadd.xlane.f32.xlu0 %v150
  %v152 = vpop.xlane.xlu0 %151
  %v153 = vld [vmem:[#allocation2] sm:$0x1]
  %v155 = vperm.slane %v153, 0
  %v157 = vadd.f32 %v152, %v155
  %vm158 = vcmask 7168
  %159 = vst.msk [vmem:[%s7] sm:$0xff] %vm158, %v157
  // Predicated region
  $region30: #{tpu_custom_call.1} parent=0 // pred_check
    _
  $region31: #{tpu_custom_call.1} parent=0 // pred_check_branch
    %161 = sbr.rel (0) target = $region33
  $region32: #{tpu_custom_call.1} parent=0 // pred_region
    _
  $region33: #{tpu_custom_call.1} parent=0 // pred_fallthru
    _
  // Predicated region
  $region34: #{tpu_custom_call.1} parent=0 // pred_check
    _
  $region35: #{tpu_custom_call.1} parent=0 // pred_check_branch
    %163 = sbr.rel (0) target = $region37
  $region36: #{tpu_custom_call.1} parent=0 // pred_region
    _
  $region37: #{tpu_custom_call.1} parent=0 // pred_fallthru
    _

</llo_original>
